<compile_context>
chip_gen: v7x
topology: tpu7x:2x2x1
jax: 0.10.0
libtpu: 0.0.40
codegen_flags: <defaults>
</compile_context>

<pallas_src>
import functools
import math

import jax
import jax.numpy as jnp
from jax.experimental import pallas as pl
from jax.experimental.pallas import tpu as pltpu


_LANE = 128


def _sublane_multiple(dtype) -> int:
    """Second-minor tiling granularity for a given dtype."""
    itemsize = jnp.dtype(dtype).itemsize
    if itemsize >= 4:
        return 8
    if itemsize == 2:
        return 16
    return 32


def _pick_tile(total, base, max_tile):
    """Largest multiple of `base` that divides `total` and is <= max_tile (0 if none)."""
    if total % base != 0:
        return 0
    best = base
    for mult in range(2, max_tile // base + 1):
        cand = base * mult
        if total % cand == 0:
            best = cand
    return best


def _pick_pertensor_rows(total):
    """Factor a flat per-tensor size into (rows, cols) with >=128 cols when possible."""
    for r in (512, 256, 128, 64, 32, 16, 8, 4, 2):
        if total % r == 0 and total // r >= _LANE:
            return r
    return 1


def _minmax_kernel(x_ref, min_ref, max_ref, min_acc, max_acc, *, n_lane_slices):
    """Row-wise running min/max.

    grid = (row_tiles ["parallel"], col_tiles ["arbitrary"]).  The output
    block index depends only on the row-tile index, so min_ref/max_ref stay
    resident in VMEM across the column (reduction) axis.  Each column tile is
    consumed as 128-lane slices folded elementwise (VPU) into (rows, 128)
    scratch accumulators; the cross-lane reduce (XLU) runs once per row tile.
    """
    k = pl.program_id(1)
    nk = pl.num_programs(1)

    @pl.when(k == 0)
    def _():
        min_acc[...] = jnp.full_like(min_acc, jnp.inf)
        max_acc[...] = jnp.full_like(max_acc, -jnp.inf)

    # Cast each native-dtype slice to f32 immediately after load, before any
    # min/max (v5e has no bf16 VPU).  Static ref slices are zero-cost views.
    for j in range(n_lane_slices):
        sl = x_ref[:, j * _LANE:(j + 1) * _LANE].astype(jnp.float32)
        min_acc[...] = jnp.minimum(min_acc[...], sl)
        max_acc[...] = jnp.maximum(max_acc[...], sl)

    @pl.when(k == nk - 1)
    def _():
        min_ref[...] = jnp.min(min_acc[...], axis=1, keepdims=True)
        max_ref[...] = jnp.max(max_acc[...], axis=1, keepdims=True)


def _rowwise_minmax(x2d, *, target_rows=256, target_cols=2048):
    """x2d: (R, K) native dtype -> ((R,), (R,)) f32 per-row min / max.

    The Pallas kernel reduces the 128-aligned column prefix; a <=127-column
    ragged tail (if any) is folded in with a tiny plain-JAX reduce.
    """
    R, K = x2d.shape
    dtype = x2d.dtype
    sub = _sublane_multiple(dtype)

    K_aligned = (K // _LANE) * _LANE
    if K_aligned == 0:
        # Fewer than 128 columns: not worth a lane-tiled kernel.
        xf = x2d.astype(jnp.float32)
        return jnp.min(xf, axis=1), jnp.max(xf, axis=1)

    tk = _pick_tile(K_aligned, _LANE, target_cols)   # multiple of 128, divides K_aligned
    tr = _pick_tile(R, sub, target_rows)             # multiple of sublane, divides R
    if tr == 0:
        tr = R                                       # full-extent rows: always legal

    n_lane_slices = tk // _LANE
    grid = (R // tr, K_aligned // tk)
    itemsize = jnp.dtype(dtype).itemsize
    bytes_accessed = R * K_aligned * itemsize + 2 * R * 4

    out_min, out_max = pl.pallas_call(
        functools.partial(_minmax_kernel, n_lane_slices=n_lane_slices),
        out_shape=(
            jax.ShapeDtypeStruct((R, 1), jnp.float32),
            jax.ShapeDtypeStruct((R, 1), jnp.float32),
        ),
        grid_spec=pltpu.PrefetchScalarGridSpec(
            num_scalar_prefetch=0,
            grid=grid,
            in_specs=[pl.BlockSpec((tr, tk), lambda r, k: (r, k))],
            out_specs=(
                pl.BlockSpec((tr, 1), lambda r, k: (r, 0)),
                pl.BlockSpec((tr, 1), lambda r, k: (r, 0)),
            ),
            scratch_shapes=[
                pltpu.VMEM((tr, _LANE), jnp.float32),
                pltpu.VMEM((tr, _LANE), jnp.float32),
            ],
        ),
        compiler_params=pltpu.CompilerParams(
            # Row axis shards across v7x's two TensorCores; column axis is the
            # sequential reduction.  Blocks stay <= ~2 MiB (4 MiB double
            # buffered), well under every generation's scoped VMEM default.
            dimension_semantics=("parallel", "arbitrary"),
        ),
        cost_estimate=pl.CostEstimate(
            flops=2 * R * K_aligned,
            transcendentals=0,
            bytes_accessed=int(bytes_accessed),
        ),
    )(x2d)

    row_min = out_min[:, 0]
    row_max = out_max[:, 0]

    if K_aligned < K:
        # Ragged tail: <=127 columns per row — negligible HBM traffic.
        tail = x2d[:, K_aligned:].astype(jnp.float32)
        row_min = jnp.minimum(row_min, jnp.min(tail, axis=1))
        row_max = jnp.maximum(row_max, jnp.max(tail, axis=1))

    return row_min, row_max


@functools.partial(jax.jit, static_argnames=("per_channel", "axis"))
def _estimate_range(x, *, per_channel, axis):
    if per_channel:
        ax = 0 if axis is None else axis % x.ndim
        lead = math.prod(x.shape[:ax])           # 1 when ax == 0
        c = x.shape[ax]
        k = math.prod(x.shape[ax + 1:])
        # Row-major view (no transpose / moveaxis): rows are (lead, channel).
        x2d = x.reshape(lead * c, k)
        rmin, rmax = _rowwise_minmax(x2d)        # (lead*c,)
        if lead > 1:
            rmin = jnp.min(rmin.reshape(lead, c), axis=0)
            rmax = jnp.max(rmax.reshape(lead, c), axis=0)
        return rmin, rmax                        # (c,), (c,)
    total = x.size
    rows = _pick_pertensor_rows(total)
    x2d = x.reshape(rows, total // rows)         # free view of the flat tensor
    rmin, rmax = _rowwise_minmax(x2d)
    return jnp.min(rmin), jnp.max(rmax)          # scalars


class RangeEstimatorPallas:
    """JAX/Pallas port of the aihwkit range-estimation forward path.

    Returns / stores (current_xmin, current_xmax) for the input tensor,
    per-tensor or per-channel along `axis` — the data-range statistics that
    MSE_Estimator._define_search_range consumes.
    """

    def __init__(self, per_channel=False, quantizer=None, axis=None, n_groups=None):
        self.per_channel = per_channel
        self.quantizer = quantizer          # unused: MSE candidate search not translated
        self.axis = axis
        self.n_groups = n_groups
        self.per_group_range_estimation = False
        self.ranges = None
        self.current_xmin = None
        self.current_xmax = None

    def reset(self):
        self.current_xmin = None
        self.current_xmax = None

    def __call__(self, x):
        x = jnp.asarray(x)                   # keep native dtype; cast happens in-kernel
        xmin, xmax = _estimate_range(x, per_channel=self.per_channel, axis=self.axis)
        self.current_xmin = xmin
        self.current_xmax = xmax
        return self.current_xmin, self.current_xmax


# Alias acknowledging the module under translation (range-estimation path only).
MSE_EstimatorPallas = RangeEstimatorPallas


if __name__ == "__main__":
    key = jax.random.PRNGKey(0)
    x = jax.random.normal(key, (2, 4, 16, 16), dtype=jnp.float32)   # NCHW

    # Per-tensor estimator (f32).
    est_tensor = RangeEstimatorPallas(per_channel=False)
    xmin_t, xmax_t = est_tensor(x)

    # Per-channel estimator along the channel axis (axis=1 in NCHW).
    est_channel = RangeEstimatorPallas(per_channel=True, axis=1)
    xmin_c, xmax_c = est_channel(x)

    # bf16 input: native-dtype DMA, cast inside the kernel.
    x_bf = x.astype(jnp.bfloat16)
    est_bf = RangeEstimatorPallas(per_channel=False)
    xmin_b, xmax_b = est_bf(x_bf)

    # Ragged columns (H*W = 225, not a multiple of 128): aligned-kernel + tail path.
    x_odd = jax.random.normal(jax.random.PRNGKey(1), (2, 4, 15, 15), dtype=jnp.float32)
    est_odd = RangeEstimatorPallas(per_channel=True, axis=1)
    xmin_o, xmax_o = est_odd(x_odd)

    jax.block_until_ready((xmin_t, xmax_t, xmin_c, xmax_c,
                           xmin_b, xmax_b, xmin_o, xmax_o))

    # Reference checks against plain JAX reductions.
    assert jnp.allclose(xmin_t, jnp.min(x)), (xmin_t, jnp.min(x))
    assert jnp.allclose(xmax_t, jnp.max(x)), (xmax_t, jnp.max(x))
    assert xmin_c.shape == (4,) and xmax_c.shape == (4,)
    assert jnp.allclose(xmin_c, jnp.min(x, axis=(0, 2, 3)))
    assert jnp.allclose(xmax_c, jnp.max(x, axis=(0, 2, 3)))
    assert jnp.allclose(xmin_b, jnp.min(x_bf.astype(jnp.float32)))
    assert jnp.allclose(xmax_b, jnp.max(x_bf.astype(jnp.float32)))
    assert jnp.allclose(xmin_o, jnp.min(x_odd, axis=(0, 2, 3)))
    assert jnp.allclose(xmax_o, jnp.max(x_odd, axis=(0, 2, 3)))

    print("KERNEL_OK")
</pallas_src>

<mosaic_0001>
module attributes {stable_mosaic.version = 11 : i64} {
  func.func @_minmax_kernel(%arg0: i32, %arg1: i32, %arg2: memref<16x128xf32, #tpu.memory_space<vmem>>, %arg3: memref<16x1xf32, #tpu.memory_space<vmem>>, %arg4: memref<16x1xf32, #tpu.memory_space<vmem>>, %arg5: memref<16x128xf32, #tpu.memory_space<vmem>>, %arg6: memref<16x128xf32, #tpu.memory_space<vmem>>) attributes {dimension_semantics = [#tpu.dimension_semantics<parallel>, #tpu.dimension_semantics<arbitrary>], iteration_bounds = array<i64: 1, 1>, scalar_prefetch = 0 : i64, scratch_operands = 2 : i64, tpu.core_type = #tpu.core_type<tc>, window_params = [{transform_indices = @transform_0, window_bounds = array<i64: 16, 128>}, {transform_indices = @transform_1, window_bounds = array<i64: 16, 1>}, {transform_indices = @transform_2, window_bounds = array<i64: 16, 1>}]} {
    %c0_i32 = arith.constant 0 : i32
    %0 = arith.cmpi eq, %arg1, %c0_i32 : i32
    %1 = arith.extui %0 : i1 to i32
    %c0_i32_0 = arith.constant 0 : i32
    %2 = arith.cmpi ne, %1, %c0_i32_0 : i32
    scf.if %2 {
      %cst = arith.constant 0x7F800000 : f32
      %13 = vector.broadcast %cst : f32 to vector<16x128xf32>
      %c0_12 = arith.constant 0 : index
      %c0_13 = arith.constant 0 : index
      %14 = vector.load %arg5[%c0_12, %c0_13] : memref<16x128xf32, #tpu.memory_space<vmem>>, vector<16x128xf32>
      tpu.vector_store %arg5[%c0_12, %c0_13], %13 {strides = array<i32>} : memref<16x128xf32, #tpu.memory_space<vmem>>, vector<16x128xf32>,
      %cst_14 = arith.constant 0xFF800000 : f32
      %15 = vector.broadcast %cst_14 : f32 to vector<16x128xf32>
      %c0_15 = arith.constant 0 : index
      %c0_16 = arith.constant 0 : index
      %16 = vector.load %arg6[%c0_15, %c0_16] : memref<16x128xf32, #tpu.memory_space<vmem>>, vector<16x128xf32>
      tpu.vector_store %arg6[%c0_15, %c0_16], %15 {strides = array<i32>} : memref<16x128xf32, #tpu.memory_space<vmem>>, vector<16x128xf32>,
    } else {
    }
    %c0 = arith.constant 0 : index
    %c0_1 = arith.constant 0 : index
    %3 = vector.load %arg2[%c0, %c0_1] : memref<16x128xf32, #tpu.memory_space<vmem>>, vector<16x128xf32>
    %c0_2 = arith.constant 0 : index
    %c0_3 = arith.constant 0 : index
    %4 = vector.load %arg5[%c0_2, %c0_3] : memref<16x128xf32, #tpu.memory_space<vmem>>, vector<16x128xf32>
    %5 = arith.minimumf %4, %3 : vector<16x128xf32>
    %c0_4 = arith.constant 0 : index
    %c0_5 = arith.constant 0 : index
    %6 = vector.load %arg5[%c0_4, %c0_5] : memref<16x128xf32, #tpu.memory_space<vmem>>, vector<16x128xf32>
    tpu.vector_store %arg5[%c0_4, %c0_5], %5 {strides = array<i32>} : memref<16x128xf32, #tpu.memory_space<vmem>>, vector<16x128xf32>,
    %c0_6 = arith.constant 0 : index
    %c0_7 = arith.constant 0 : index
    %7 = vector.load %arg6[%c0_6, %c0_7] : memref<16x128xf32, #tpu.memory_space<vmem>>, vector<16x128xf32>
    %8 = arith.maximumf %7, %3 : vector<16x128xf32>
    %c0_8 = arith.constant 0 : index
    %c0_9 = arith.constant 0 : index
    %9 = vector.load %arg6[%c0_8, %c0_9] : memref<16x128xf32, #tpu.memory_space<vmem>>, vector<16x128xf32>
    tpu.vector_store %arg6[%c0_8, %c0_9], %8 {strides = array<i32>} : memref<16x128xf32, #tpu.memory_space<vmem>>, vector<16x128xf32>,
    %c0_i32_10 = arith.constant 0 : i32
    %10 = arith.cmpi eq, %arg1, %c0_i32_10 : i32
    %11 = arith.extui %10 : i1 to i32
    %c0_i32_11 = arith.constant 0 : i32
    %12 = arith.cmpi ne, %11, %c0_i32_11 : i32
    scf.if %12 {
      %c0_12 = arith.constant 0 : index
      %c0_13 = arith.constant 0 : index
      %13 = vector.load %arg5[%c0_12, %c0_13] : memref<16x128xf32, #tpu.memory_space<vmem>>, vector<16x128xf32>
      %cst = arith.constant dense<0x7F800000> : vector<16xf32>
      %14 = vector.multi_reduction <minimumf>, %13, %cst [1] : vector<16x128xf32> to vector<16xf32>
      %15 = vector.shape_cast %14 : vector<16xf32> to vector<16x1xf32>
      %c0_14 = arith.constant 0 : index
      %c0_15 = arith.constant 0 : index
      %16 = vector.load %arg3[%c0_14, %c0_15] : memref<16x1xf32, #tpu.memory_space<vmem>>, vector<16x1xf32>
      tpu.vector_store %arg3[%c0_14, %c0_15], %15 {strides = array<i32>} : memref<16x1xf32, #tpu.memory_space<vmem>>, vector<16x1xf32>,
      %c0_16 = arith.constant 0 : index
      %c0_17 = arith.constant 0 : index
      %17 = vector.load %arg6[%c0_16, %c0_17] : memref<16x128xf32, #tpu.memory_space<vmem>>, vector<16x128xf32>
      %cst_18 = arith.constant dense<0xFF800000> : vector<16xf32>
      %18 = vector.multi_reduction <maximumf>, %17, %cst_18 [1] : vector<16x128xf32> to vector<16xf32>
      %19 = vector.shape_cast %18 : vector<16xf32> to vector<16x1xf32>
      %c0_19 = arith.constant 0 : index
      %c0_20 = arith.constant 0 : index
      %20 = vector.load %arg4[%c0_19, %c0_20] : memref<16x1xf32, #tpu.memory_space<vmem>>, vector<16x1xf32>
      tpu.vector_store %arg4[%c0_19, %c0_20], %19 {strides = array<i32>} : memref<16x1xf32, #tpu.memory_space<vmem>>, vector<16x1xf32>,
    } else {
    }
    return
  }
  func.func @transform_0(%arg0: i32, %arg1: i32) -> (i32, i32) {
    %c0_i32 = arith.constant 0 : i32
    return %arg0, %arg1 : i32, i32
  }
  func.func @transform_1(%arg0: i32, %arg1: i32) -> (i32, i32) {
    %c0_i32 = arith.constant 0 : i32
    %c0_i32_0 = arith.constant 0 : i32
    return %arg0, %c0_i32 : i32, i32
  }
  func.func @transform_2(%arg0: i32, %arg1: i32) -> (i32, i32) {
    %c0_i32 = arith.constant 0 : i32
    %c0_i32_0 = arith.constant 0 : i32
    return %arg0, %c0_i32 : i32, i32
  }
}

</mosaic_0001>

<llo_original>
// kernel: _estimate_range.1
$region0: #{_estimate_range.1}
  #allocation0 [shape = 'u32[]', space=smem, size = 0x4, offset = 0x4, fixed_abs, tag = 'smem constant byte address 0x4 - core index']
  #allocation1 [shape = 'u32[144,128]{1,0:T(1,128)}', space=vmem, size = 0x12000, scoped, tag = 'internal scratch']
  #allocation2 [shape = 'f32[16,128]{1,0:T(8,128)}', space=vmem, size = 0x2000, scoped, tag = 'scratch operand']
  #allocation3 [shape = 'f32[16,128]{1,0:T(8,128)}', space=vmem, size = 0x2000, scoped, tag = 'scratch operand']
  %s0 = inlined_call_operand.vmem [shape: f32[16,128], index: 0, kind: input, shape index: {}]
  %s1 = inlined_call_operand.vmem [shape: f32[16,1], index: 1, kind: output, shape index: {0}]
  %s2 = inlined_call_operand.vmem [shape: f32[16,1], index: 2, kind: output, shape index: {1}]
  %3 = xla_tuple %s1, %s2
  %s4 = sld [smem:[#allocation0]]
  $region30: #{_estimate_range.1} parent=0
    _
  %s6 = ssub.s32 1, %s4
  %s7 = scalar_select 0, %s6, %s4
  // Predicated region
  $region2: #{_estimate_range.1} parent=0 // pred_check
    _
  $region3: #{_estimate_range.1} parent=0 // pred_check_branch
    %9 = sbr.rel (0) target = $region5
  $region4: #{_estimate_range.1} parent=0 // pred_region
    _
  $region5: #{_estimate_range.1} parent=0 // pred_fallthru
    _
  %p10 = scmp.eq.s32.totalorder 0, 0
  // Predicated region
  $region6: #{_estimate_range.1} parent=0 // pred_check
    %p11 = pneg %p10
  $region7: #{_estimate_range.1} parent=0 // pred_check_branch
    %13 = sbr.rel (%p11) target = $region9
  $region8: #{_estimate_range.1} parent=0 // pred_region
    %14 = vst [vmem:[#allocation2] sm:$0xff] inf
    %15 = vst [vmem:[#allocation2 + $0x8] sm:$0xff] inf
    %16 = vst [vmem:[#allocation3] sm:$0xff] -inf
    %17 = vst [vmem:[#allocation3 + $0x8] sm:$0xff] -inf
  $region9: #{_estimate_range.1} parent=0 // pred_fallthru
    _
  %v18 = vld [vmem:[%s0] sm:$0xff]
  %v19 = vld [vmem:[%s0 + $0x8] sm:$0xff]
  %v20 = vld [vmem:[#allocation2] sm:$0xff]
  %v21 = vld [vmem:[#allocation2 + $0x8] sm:$0xff]
  %v22 = vmin.f32 %v20, %v18
  %v23 = vmin.f32 %v21, %v19
  %24 = vst [vmem:[#allocation2] sm:$0xff] %v22
  %25 = vst [vmem:[#allocation2 + $0x8] sm:$0xff] %v23
  %v26 = vld [vmem:[#allocation3] sm:$0xff]
  %v27 = vld [vmem:[#allocation3 + $0x8] sm:$0xff]
  %v28 = vmax.f32 %v26, %v18
  %v29 = vmax.f32 %v27, %v19
  %30 = vst [vmem:[#allocation3] sm:$0xff] %v28
  %31 = vst [vmem:[#allocation3 + $0x8] sm:$0xff] %v29
  // Predicated region
  $region10: #{_estimate_range.1} parent=0 // pred_check
    %p32 = pneg %p10
  $region11: #{_estimate_range.1} parent=0 // pred_check_branch
    %34 = sbr.rel (%p32) target = $region13
  $region12: #{_estimate_range.1} parent=0 // pred_region
    %v35 = vld [vmem:[#allocation2] sm:$0xff]
    %v36 = vld [vmem:[#allocation2 + $0x8] sm:$0xff]
    %37 = vmin.xlane.f32.xlu0 %v35
    %v38 = vpop.xlane.xlu0 %37
    %39 = vmin.xlane.f32.xlu0 %v36
    %v40 = vpop.xlane.xlu0 %39
    %vm41 = vcmask 7168
    %42 = vst.msk [vmem:[%s1] sm:$0xff] %vm41, %v38
    %43 = vst.msk [vmem:[%s1 + $0x8] sm:$0xff] %vm41, %v40
    %v44 = vld [vmem:[#allocation3] sm:$0xff]
    %v45 = vld [vmem:[#allocation3 + $0x8] sm:$0xff]
    %46 = vmax.xlane.f32.xlu0 %v44
    %v47 = vpop.xlane.xlu0 %46
    %48 = vmax.xlane.f32.xlu0 %v45
    %v49 = vpop.xlane.xlu0 %48
    %50 = vst.msk [vmem:[%s2] sm:$0xff] %vm41, %v47
    %51 = vst.msk [vmem:[%s2 + $0x8] sm:$0xff] %vm41, %v49
  $region13: #{_estimate_range.1} parent=0 // pred_fallthru
    _
  // Predicated region
  $region14: #{_estimate_range.1} parent=0 // pred_check
    _
  $region15: #{_estimate_range.1} parent=0 // pred_check_branch
    %53 = sbr.rel (0) target = $region17
  $region16: #{_estimate_range.1} parent=0 // pred_region
    _
  $region17: #{_estimate_range.1} parent=0 // pred_fallthru
    _
  // Predicated region
  $region18: #{_estimate_range.1} parent=0 // pred_check
    _
  $region19: #{_estimate_range.1} parent=0 // pred_check_branch
    %55 = sbr.rel (0) target = $region21
  $region20: #{_estimate_range.1} parent=0 // pred_region
    _
  $region21: #{_estimate_range.1} parent=0 // pred_fallthru
    _
  // Predicated region
  $region22: #{_estimate_range.1} parent=0 // pred_check
    _
  $region23: #{_estimate_range.1} parent=0 // pred_check_branch
    %57 = sbr.rel (0) target = $region25
  $region24: #{_estimate_range.1} parent=0 // pred_region
    _
  $region25: #{_estimate_range.1} parent=0 // pred_fallthru
    _
  // Predicated region
  $region26: #{_estimate_range.1} parent=0 // pred_check
    _
  $region27: #{_estimate_range.1} parent=0 // pred_check_branch
    %59 = sbr.rel (0) target = $region29
  $region28: #{_estimate_range.1} parent=0 // pred_region
    _
  $region29: #{_estimate_range.1} parent=0 // pred_fallthru
    _

</llo_original>
